<compile_context>
chip_gen: v7x
topology: tpu7x:2x2x1
jax: 0.10.0
libtpu: 0.0.40
codegen_flags: <defaults>
</compile_context>

<pallas_src>
import functools

import jax
import jax.numpy as jnp
from jax.experimental import pallas as pl
from jax.experimental.pallas import tpu as pltpu

LANE = 128       # vreg lane width (last-dim alignment target)
SUBLANE = 8      # vreg sublane count (second-to-last-dim alignment target)
_VMEM_BUDGET = 24 * 1024 * 1024   # soft working-set target (bytes), v7x-safe
_FALLBACK_FLOPS = 1 << 27         # below ~134 MFLOP a single XLA dot wins


def _round_up(x: int, m: int) -> int:
    return ((x + m - 1) // m) * m


def _pick_tile_n(d_out: int, max_tile_n: int = 2048) -> int:
    """Output-column tile: full (unpadded) d_out when small / unaligned,
    otherwise a multiple of 128 that divides d_out."""
    if d_out <= max_tile_n or d_out % LANE != 0:
        return d_out
    t = max_tile_n - (max_tile_n % LANE)
    while t > LANE and d_out % t != 0:
        t -= LANE
    return t if d_out % t == 0 else d_out


def _linear_kernel(x_ref, w_ref, b_ref, o_ref):
    # bf16 operands into the MXU (cast in-kernel: x/W stay f32 in HBM, no
    # padded copies); f32 accumulation; bias add + store stay f32 (v5e-safe).
    x = x_ref[...].astype(jnp.bfloat16)
    w = w_ref[...].astype(jnp.bfloat16)
    acc = jnp.dot(x, w, preferred_element_type=jnp.float32)
    o_ref[...] = (acc + b_ref[...]).astype(o_ref.dtype)


@functools.partial(jax.jit, static_argnames=("tile_m", "force_pallas"))
def base_model_forward(x, w, b, *, tile_m: int = 2048, force_pallas: bool = False):
    n, d_in = x.shape
    d_in_w, d_out = w.shape
    assert d_in == d_in_w
    assert b.shape == (d_out,)

    # Small-problem fallback: a single fused XLA dot beats the pallas_call
    # pipeline until the problem is roughly HBM-roofline sized.
    if not force_pallas and 2 * n * d_in * d_out < _FALLBACK_FLOPS:
        return jnp.dot(x, w, preferred_element_type=jnp.float32) + b.astype(jnp.float32)

    # --- tiling ---------------------------------------------------------
    tile_n = _pick_tile_n(d_out)
    grid_n = d_out // tile_n

    # Row tile: multiple of 8, no larger than ceil(N/2) rounded up so that
    # grid_m >= 2 and both v7x TensorCores get work (free on v5e/v6e).
    tile_m = max(SUBLANE, min(tile_m,
                              _round_up(n, SUBLANE),
                              _round_up(pl.cdiv(n, 2), SUBLANE)))
    tile_m = _round_up(tile_m, SUBLANE)

    # Double-buffer-aware working-set estimate; shrink tile_m to fit budget.
    def vmem_est(tm):
        return (2 * tm * d_in * x.dtype.itemsize          # x blocks
                + 2 * d_in * tile_n * w.dtype.itemsize    # W blocks
                + 2 * tile_n * 4                          # bias block
                + 2 * tm * tile_n * 4)                    # f32 out blocks
    while vmem_est(tile_m) > _VMEM_BUDGET and tile_m > 256:
        tile_m = _round_up(tile_m // 2, SUBLANE)

    grid_m = pl.cdiv(n, tile_m)

    b2 = b.reshape(1, d_out).astype(jnp.float32)

    # Truthful (unpadded) cost hint for the XLA scheduler.
    cost = pl.CostEstimate(
        flops=2 * n * d_in * d_out,
        bytes_accessed=(n * d_in * x.dtype.itemsize
                        + d_in * d_out * w.dtype.itemsize
                        + d_out * 4
                        + n * d_out * 4),
        transcendentals=0,
    )

    vmem_limit = int(min(64 * 2**20, max(16 * 2**20, 2 * vmem_est(tile_m))))

    return pl.pallas_call(
        _linear_kernel,
        out_shape=jax.ShapeDtypeStruct((n, d_out), jnp.float32),
        grid_spec=pl.GridSpec(
            grid=(grid_m, grid_n),
            in_specs=[
                # x: one row-tile per grid step, full (unpadded) feature dim.
                pl.BlockSpec((tile_m, d_in), lambda i, j: (i, 0)),
                # W / b: column-tiled (resident when grid_n == 1).
                pl.BlockSpec((d_in, tile_n), lambda i, j: (0, j)),
                pl.BlockSpec((1, tile_n), lambda i, j: (0, j)),
            ],
            out_specs=pl.BlockSpec((tile_m, tile_n), lambda i, j: (i, j)),
        ),
        compiler_params=pltpu.CompilerParams(
            dimension_semantics=("parallel", "parallel"),
            vmem_limit_bytes=vmem_limit,
        ),
        cost_estimate=cost,
    )(x, w, b2)


if __name__ == "__main__":
    # TODO(synk): BaseModel.forward / loss / reset_parameters are abstract in
    # the PyTorch source; only the canonical linear forward is implemented.
    key = jax.random.PRNGKey(0)
    kx, kw, kb = jax.random.split(key, 3)

    N = 1024          # number of nodes (enough rows to exercise the row grid)
    INPUT_DIM = 32
    OUTPUT_DIM = 16

    x = jax.random.normal(kx, (N, INPUT_DIM), dtype=jnp.float32)
    # Deterministic parameter init (PyTorch-Linear-style uniform bound).
    bound = 1.0 / (INPUT_DIM ** 0.5)
    w = jax.random.uniform(kw, (INPUT_DIM, OUTPUT_DIM), jnp.float32,
                           minval=-bound, maxval=bound)
    b = jax.random.uniform(kb, (OUTPUT_DIM,), jnp.float32,
                           minval=-bound, maxval=bound)

    # Force the Pallas path (the auto heuristic would use the jnp.dot fallback
    # at shapes this small).
    out = base_model_forward(x, w, b, force_pallas=True)
    jax.block_until_ready(out)

    # Reference with the same bf16 operand rounding the MXU path applies
    # (accumulation is f32 on both sides).
    ref = (x.astype(jnp.bfloat16).astype(jnp.float32)
           @ w.astype(jnp.bfloat16).astype(jnp.float32)) + b
    assert out.shape == (N, OUTPUT_DIM)
    assert jnp.allclose(out, ref, atol=1e-3, rtol=1e-3), \
        float(jnp.max(jnp.abs(out - ref)))

    # Auto path (small-shape fallback) also runs cleanly.
    out_auto = base_model_forward(x, w, b)
    jax.block_until_ready(out_auto)
    assert out_auto.shape == (N, OUTPUT_DIM)

    print("KERNEL_OK")
</pallas_src>

<mosaic_0001>
module attributes {stable_mosaic.version = 11 : i64} {
  func.func @_linear_kernel(%arg0: i32, %arg1: i32, %arg2: memref<512x32xf32, #tpu.memory_space<vmem>>, %arg3: memref<32x16xf32, #tpu.memory_space<vmem>>, %arg4: memref<1x16xf32, #tpu.memory_space<vmem>>, %arg5: memref<512x16xf32, #tpu.memory_space<vmem>>) attributes {dimension_semantics = [#tpu.dimension_semantics<parallel>, #tpu.dimension_semantics<parallel>], iteration_bounds = array<i64: 2, 1>, scalar_prefetch = 0 : i64, scratch_operands = 0 : i64, tpu.core_type = #tpu.core_type<tc>, window_params = [{transform_indices = @transform_0, window_bounds = array<i64: 512, 32>}, {transform_indices = @transform_1, window_bounds = array<i64: 32, 16>}, {transform_indices = @transform_2, window_bounds = array<i64: 1, 16>}, {transform_indices = @transform_3, window_bounds = array<i64: 512, 16>}]} {
    %c0 = arith.constant 0 : index
    %c0_0 = arith.constant 0 : index
    %0 = vector.load %arg2[%c0, %c0_0] : memref<512x32xf32, #tpu.memory_space<vmem>>, vector<512x32xf32>
    %1 = arith.truncf %0 : vector<512x32xf32> to vector<512x32xbf16>
    %c0_1 = arith.constant 0 : index
    %c0_2 = arith.constant 0 : index
    %2 = vector.load %arg3[%c0_1, %c0_2] : memref<32x16xf32, #tpu.memory_space<vmem>>, vector<32x16xf32>
    %3 = arith.truncf %2 : vector<32x16xf32> to vector<32x16xbf16>
    %cst = arith.constant dense<0.000000e+00> : vector<512x16xf32>
    %4 = tpu.matmul %1, %3, %cst {dimension_numbers = #tpu.dot_dimension_numbers<[1], [0], [0], [1], [0, 0, 1, 1], [], []>} : vector<512x32xbf16>, vector<32x16xbf16>, vector<512x16xf32> -> vector<512x16xf32>
    %c0_3 = arith.constant 0 : index
    %c0_4 = arith.constant 0 : index
    %5 = vector.load %arg4[%c0_3, %c0_4] : memref<1x16xf32, #tpu.memory_space<vmem>>, vector<1x16xf32>
    %6 = vector.broadcast %5 : vector<1x16xf32> to vector<512x16xf32>
    %7 = arith.addf %4, %6 : vector<512x16xf32>
    %c0_5 = arith.constant 0 : index
    %c0_6 = arith.constant 0 : index
    %8 = vector.load %arg5[%c0_5, %c0_6] : memref<512x16xf32, #tpu.memory_space<vmem>>, vector<512x16xf32>
    tpu.vector_store %arg5[%c0_5, %c0_6], %7 {strides = array<i32>} : memref<512x16xf32, #tpu.memory_space<vmem>>, vector<512x16xf32>,
    return
  }
  func.func @transform_0(%arg0: i32, %arg1: i32) -> (i32, i32) {
    %c0_i32 = arith.constant 0 : i32
    %c0_i32_0 = arith.constant 0 : i32
    return %arg0, %c0_i32 : i32, i32
  }
  func.func @transform_1(%arg0: i32, %arg1: i32) -> (i32, i32) {
    %c0_i32 = arith.constant 0 : i32
    %c0_i32_0 = arith.constant 0 : i32
    return %c0_i32, %arg1 : i32, i32
  }
  func.func @transform_2(%arg0: i32, %arg1: i32) -> (i32, i32) {
    %c0_i32 = arith.constant 0 : i32
    %c0_i32_0 = arith.constant 0 : i32
    return %c0_i32, %arg1 : i32, i32
  }
  func.func @transform_3(%arg0: i32, %arg1: i32) -> (i32, i32) {
    %c0_i32 = arith.constant 0 : i32
    return %arg0, %arg1 : i32, i32
  }
}

</mosaic_0001>

<llo_original>
// kernel: base_model_forward.1
$region0: #{base_model_forward.1}
  #allocation0 [shape = 'u32[]', space=smem, size = 0x4, offset = 0x4, fixed_abs, tag = 'smem constant byte address 0x4 - core index']
  #allocation1 [shape = 'u32[144,128]{1,0:T(1,128)}', space=vmem, size = 0x12000, scoped, tag = 'internal scratch']
  %s0 = inlined_call_operand.vmem [shape: f32[1024,32], index: 0, kind: input, shape index: {}]
  %s1 = inlined_call_operand.vmem [shape: f32[32,16], index: 1, kind: input, shape index: {}]
  %s2 = inlined_call_operand.vmem [shape: f32[1,16], index: 2, kind: input, shape index: {}]
  %s3 = inlined_call_operand.vmem [shape: f32[1024,16], index: 3, kind: output, shape index: {}]
  %s4 = sld [smem:[#allocation0]]
  $region45: #{base_model_forward.1} parent=0
    _
  %s6 = ssub.s32 1, %s4
  %s7 = scalar_select 0, %s6, %s4
  loop: start=0, step=1, limit=4
  $region2: #{base_model_forward.1} parent=0 // loop_pre_header
    _
  $region3: #{base_model_forward.1} parent=0 // loop_header
    %s9 = sphi 0, %s13
    %p10 = scmp.ge.s32.totalorder %s9, 4
    %s16 = sphi 0, %s28
    %s17 = sphi 0, %s24
    %s18 = sphi 0, %s16
    %s19 = sphi 0, %s17
    %s20 = sphi 0, %s18
    %s21 = sphi 0, %s19
    %s31 = sphi 0, %s33
    %s34 = sphi 0, %s31
    %s35 = sphi 0, %s34
    %s51 = sphi 0, %s35
    %s57 = sphi 0, %s59
    %s60 = sphi 0, %s57
    %s61 = sphi 0, %s60
    %s77 = sphi 0, %s61
    %s83 = sphi 0, %s85
    %s86 = sphi 0, %s83
    %s87 = sphi 0, %s86
    %s103 = sphi 0, %s87
    %s111 = sphi 0, %s113
    %s114 = sphi 0, %s111
    %s115 = sphi 0, %s114
    %s131 = sphi 0, %s115
  $region4: #{base_model_forward.1} parent=0 // loop_header_branch
    %12 = sbr.rel (%p10) target = $region8
  $region5: #{base_model_forward.1} parent=0 // loop_body
    %s14 = ssub.s32 %s9, 1
    %s15 = ssub.s32 %s9, 2
    %s22 = sadd.s32 1, %s17
    %p23 = scmp.ge.s32.totalorder %s22, 1
    %s24 = scalar_select %p23, 0, %s22
    %s25 = sadd.s32 1, %s16
    %s26 = scalar_select %p23, %s25, %s16
    %p27 = scmp.ge.s32.totalorder %s26, 2
    %s28 = scalar_select %p27, 0, %s26
    %s29 = ssub.s32 %s16, %s28
    %p30 = scmp.eq.s32.totalorder %s29, 0
    %s32 = sadd.s32 %s31, 1
    %s33 = scalar_select %p30, %s31, %s32
    %p36 = pneg %p30
    %p37 = scmp.eq.s32.totalorder %s9, 1
    %p38 = por %p36, %p37
    %p39 = scmp.ne.s32.totalorder %s31, %s34
    %p40 = scmp.eq.s32.totalorder %s9, 0
    %p41 = por %p39, %p40
    %p42 = scmp.ne.s32.totalorder %s31, %s34
    %p43 = scmp.eq.s32.totalorder %s14, 1
    %p44 = por %p42, %p43
    %p45 = scmp.ne.s32.totalorder %s34, %s35
    %p46 = scmp.eq.s32.totalorder %s14, 0
    %p47 = por %p45, %p46
    %p48 = scmp.ne.s32.totalorder %s34, %s35
    %p49 = scmp.eq.s32.totalorder %s15, 1
    %p50 = por %p48, %p49
    %p52 = scmp.ne.s32.totalorder %s35, %s51
    %p53 = scmp.eq.s32.totalorder %s15, 0
    %p54 = por %p52, %p53
    %s55 = ssub.s32 %s17, %s24
    %p56 = scmp.eq.s32.totalorder %s55, 0
    %s58 = sadd.s32 %s57, 1
    %s59 = scalar_select %p56, %s57, %s58
    %p62 = pneg %p56
    %p63 = scmp.eq.s32.totalorder %s9, 1
    %p64 = por %p62, %p63
    %p65 = scmp.ne.s32.totalorder %s57, %s60
    %p66 = scmp.eq.s32.totalorder %s9, 0
    %p67 = por %p65, %p66
    %p68 = scmp.ne.s32.totalorder %s57, %s60
    %p69 = scmp.eq.s32.totalorder %s14, 1
    %p70 = por %p68, %p69
    %p71 = scmp.ne.s32.totalorder %s60, %s61
    %p72 = scmp.eq.s32.totalorder %s14, 0
    %p73 = por %p71, %p72
    %p74 = scmp.ne.s32.totalorder %s60, %s61
    %p75 = scmp.eq.s32.totalorder %s15, 1
    %p76 = por %p74, %p75
    %p78 = scmp.ne.s32.totalorder %s61, %s77
    %p79 = scmp.eq.s32.totalorder %s15, 0
    %p80 = por %p78, %p79
    %s81 = ssub.s32 %s17, %s24
    %p82 = scmp.eq.s32.totalorder %s81, 0
    %s84 = sadd.s32 %s83, 1
    %s85 = scalar_select %p82, %s83, %s84
    %p88 = pneg %p82
    %p89 = scmp.eq.s32.totalorder %s9, 1
    %p90 = por %p88, %p89
    %p91 = scmp.ne.s32.totalorder %s83, %s86
    %p92 = scmp.eq.s32.totalorder %s9, 0
    %p93 = por %p91, %p92
    %p94 = scmp.ne.s32.totalorder %s83, %s86
    %p95 = scmp.eq.s32.totalorder %s14, 1
    %p96 = por %p94, %p95
    %p97 = scmp.ne.s32.totalorder %s86, %s87
    %p98 = scmp.eq.s32.totalorder %s14, 0
    %p99 = por %p97, %p98
    %p100 = scmp.ne.s32.totalorder %s86, %s87
    %p101 = scmp.eq.s32.totalorder %s15, 1
    %p102 = por %p100, %p101
    %p104 = scmp.ne.s32.totalorder %s87, %s103
    %p105 = scmp.eq.s32.totalorder %s15, 0
    %p106 = por %p104, %p105
    %s107 = ssub.s32 %s16, %s28
    %s108 = ssub.s32 %s17, %s24
    %s109 = sor.u32 %s107, %s108
    %p110 = scmp.eq.s32.totalorder %s109, 0
    %s112 = sadd.s32 %s111, 1
    %s113 = scalar_select %p110, %s111, %s112
    %p116 = pneg %p110
    %p117 = scmp.eq.s32.totalorder %s9, 1
    %p118 = por %p116, %p117
    %p119 = scmp.ne.s32.totalorder %s111, %s114
    %p120 = scmp.eq.s32.totalorder %s9, 0
    %p121 = por %p119, %p120
    %p122 = scmp.ne.s32.totalorder %s111, %s114
    %p123 = scmp.eq.s32.totalorder %s14, 1
    %p124 = por %p122, %p123
    %p125 = scmp.ne.s32.totalorder %s114, %s115
    %p126 = scmp.eq.s32.totalorder %s14, 0
    %p127 = por %p125, %p126
    %p128 = scmp.ne.s32.totalorder %s114, %s115
    %p129 = scmp.eq.s32.totalorder %s15, 1
    %p130 = por %p128, %p129
    %p132 = scmp.ne.s32.totalorder %s115, %s131
    %p133 = scmp.eq.s32.totalorder %s15, 0
    %p134 = por %p132, %p133
    %p135 = scmp.le.s32.totalorder 1, %s9
    %p136 = scmp.lt.s32.totalorder %s9, 3
    %p137 = pnand %p135, %p136
    %p138 = pneg %p137
    // Predicated region
    $region9: #{base_model_forward.1} parent=5 // pred_check
      _
    $region10: #{base_model_forward.1} parent=5 // pred_check_branch
      %140 = sbr.rel (%p137) target = $region12
    $region11: #{base_model_forward.1} parent=5 // pred_region
      %s141 = ssub.s32 %s9, 1
      // Predicated region
      $region13: #{base_model_forward.1} parent=11 // pred_check
        %p142 = pneg %p73
      $region14: #{base_model_forward.1} parent=11 // pred_check_branch
        %144 = sbr.rel (%p142) target = $region16
      $region15: #{base_model_forward.1} parent=11 // pred_region
        %p145 = scmp.lt.s32.totalorder %s19, 0
        %s146 = scalar_select %p145, %s19, 0
        %s147 = smul.addr %s146, 8
        %s148 = scalar_lea.vmem %s1, %s147
      $region16: #{base_model_forward.1} parent=11 // pred_fallthru
        _
      // Predicated region
      $region17: #{base_model_forward.1} parent=11 // pred_check
        %p149 = pneg %p99
      $region18: #{base_model_forward.1} parent=11 // pred_check_branch
        %151 = sbr.rel (%p149) target = $region20
      $region19: #{base_model_forward.1} parent=11 // pred_region
        %p152 = scmp.lt.s32.totalorder %s19, 0
        %s153 = scalar_select %p152, %s19, 0
        %s154 = scalar_lea.vmem %s2, %s153
      $region20: #{base_model_forward.1} parent=11 // pred_fallthru
        _
    $region12: #{base_model_forward.1} parent=5 // pred_fallthru
      _
    %p155 = scmp.lt.s32.totalorder %s9, 2
    // Predicated region
    $region21: #{base_model_forward.1} parent=5 // pred_check
      %p156 = pneg %p155
    $region22: #{base_model_forward.1} parent=5 // pred_check_branch
      %158 = sbr.rel (%p156) target = $region24
    $region23: #{base_model_forward.1} parent=5 // pred_region
      // Predicated region
      $region25: #{base_model_forward.1} parent=23 // pred_check
        %p159 = pneg %p41
      $region26: #{base_model_forward.1} parent=23 // pred_check_branch
        %161 = sbr.rel (%p159) target = $region28
      $region27: #{base_model_forward.1} parent=23 // pred_region
        %s162 = smul.u32 64, %s16
        %p163 = scmp.lt.s32.totalorder %s162, 127
        %s164 = scalar_select %p163, %s162, 127
        %s165 = smul.addr %s164, 8
        %s166 = scalar_lea.vmem %s0, %s165
        %s167 = smul.u32 64, %s16
      $region28: #{base_model_forward.1} parent=23 // pred_fallthru
        _
    $region24: #{base_model_forward.1} parent=5 // pred_fallthru
      _
    %p168 = scmp.le.s32.totalorder 1, %s9
    %p169 = scmp.lt.s32.totalorder %s9, 3
    %p170 = pnand %p168, %p169
    %p171 = pneg %p170
    // Predicated region
    $region29: #{base_model_forward.1} parent=5 // pred_check
      _
    $region30: #{base_model_forward.1} parent=5 // pred_check_branch
      %173 = sbr.rel (%p170) target = $region32
    $region31: #{base_model_forward.1} parent=5 // pred_region
      %s174 = ssub.s32 %s9, 1
      %s175 = smul.u32 64, %s18
      %p176 = scmp.lt.s32.totalorder %s175, 127
      %s177 = scalar_select %p176, %s175, 127
      %s178 = smul.addr %s177, 8
      %s179 = scalar_lea.vmem %s0, %s178
      %p180 = pneg %p47
      %p181 = pneg %p44
      %p182 = scmp.lt.s32.totalorder %s19, 0
      %s183 = scalar_select %p182, %s19, 0
      %s184 = smul.addr %s183, 8
      %s185 = scalar_lea.vmem %s1, %s184
      %p186 = pneg %p73
      %p187 = pneg %p70
      %p188 = scmp.lt.s32.totalorder %s19, 0
      %s189 = scalar_select %p188, %s19, 0
      %s190 = scalar_lea.vmem %s2, %s189
      %p191 = pneg %p99
      %p192 = pneg %p96
      %p193 = pneg %p127
      %p194 = pneg %p124
      %s195 = smul.u32 64, %s18
      %p196 = scmp.lt.s32.totalorder %s195, 127
      %s197 = scalar_select %p196, %s195, 127
      %p198 = scmp.lt.s32.totalorder %s19, 0
      %s199 = scalar_select %p198, %s19, 0
      %s200 = sadd.s32 %s199, %s197
      %s201 = smul.addr %s200, 8
      %s202 = scalar_lea.vmem %s3, %s201
      %s203 = smul.u32 64, %s18
      %p204 = scmp.lt.s32.totalorder %s203, 127
      %s205 = scalar_select %p204, %s203, 127
      %s206 = smul.addr %s205, 8
      %s207 = scalar_lea.vmem %s0, %s206
      %s208 = smul.u32 64, %s18
      %p209 = scmp.lt.s32.totalorder %s19, 0
      %s210 = scalar_select %p209, %s19, 0
      %s211 = smul.addr %s210, 8
      %s212 = scalar_lea.vmem %s1, %s211
      %p213 = scmp.lt.s32.totalorder %s19, 0
      %s214 = scalar_select %p213, %s19, 0
      %s215 = scalar_lea.vmem %s2, %s214
      %s216 = smul.u32 64, %s18
      %p217 = scmp.lt.s32.totalorder %s216, 127
      %s218 = scalar_select %p217, %s216, 127
      %p219 = scmp.lt.s32.totalorder %s19, 0
      %s220 = scalar_select %p219, %s19, 0
      %s221 = sadd.s32 %s220, %s218
      %s222 = smul.addr %s221, 8
      %s223 = scalar_lea.vmem %s3, %s222
      %s224 = smul.u32 64, %s18
      %v226 = vld [vmem:[%s207] sm:$0xff]
      %v227 = vld [vmem:[%s207 + $0x8] sm:$0xff]
      %v228 = vld [vmem:[%s207 + $0x10] sm:$0xff]
      %v229 = vld [vmem:[%s207 + $0x18] sm:$0xff]
      %v230 = vld [vmem:[%s207 + $0x20] sm:$0xff]
      %v231 = vld [vmem:[%s207 + $0x28] sm:$0xff]
      %v232 = vld [vmem:[%s207 + $0x30] sm:$0xff]
      %v233 = vld [vmem:[%s207 + $0x38] sm:$0xff]
      %v234 = vld [vmem:[%s207 + $0x40] sm:$0xff]
      %v235 = vld [vmem:[%s207 + $0x48] sm:$0xff]
      %v236 = vld [vmem:[%s207 + $0x50] sm:$0xff]
      %v237 = vld [vmem:[%s207 + $0x58] sm:$0xff]
      %v238 = vld [vmem:[%s207 + $0x60] sm:$0xff]
      %v239 = vld [vmem:[%s207 + $0x68] sm:$0xff]
      %v240 = vld [vmem:[%s207 + $0x70] sm:$0xff]
      %v241 = vld [vmem:[%s207 + $0x78] sm:$0xff]
      %v242 = vld [vmem:[%s207 + $0x80] sm:$0xff]
      %v243 = vld [vmem:[%s207 + $0x88] sm:$0xff]
      %v244 = vld [vmem:[%s207 + $0x90] sm:$0xff]
      %v245 = vld [vmem:[%s207 + $0x98] sm:$0xff]
      %v246 = vld [vmem:[%s207 + $0xa0] sm:$0xff]
      %v247 = vld [vmem:[%s207 + $0xa8] sm:$0xff]
      %v248 = vld [vmem:[%s207 + $0xb0] sm:$0xff]
      %v249 = vld [vmem:[%s207 + $0xb8] sm:$0xff]
      %v250 = vld [vmem:[%s207 + $0xc0] sm:$0xff]
      %v251 = vld [vmem:[%s207 + $0xc8] sm:$0xff]
      %v252 = vld [vmem:[%s207 + $0xd0] sm:$0xff]
      %v253 = vld [vmem:[%s207 + $0xd8] sm:$0xff]
      %v254 = vld [vmem:[%s207 + $0xe0] sm:$0xff]
      %v255 = vld [vmem:[%s207 + $0xe8] sm:$0xff]
      %v256 = vld [vmem:[%s207 + $0xf0] sm:$0xff]
      %v257 = vld [vmem:[%s207 + $0xf8] sm:$0xff]
      %v258 = vld [vmem:[%s207 + $0x100] sm:$0xff]
      %v259 = vld [vmem:[%s207 + $0x108] sm:$0xff]
      %v260 = vld [vmem:[%s207 + $0x110] sm:$0xff]
      %v261 = vld [vmem:[%s207 + $0x118] sm:$0xff]
      %v262 = vld [vmem:[%s207 + $0x120] sm:$0xff]
      %v263 = vld [vmem:[%s207 + $0x128] sm:$0xff]
      %v264 = vld [vmem:[%s207 + $0x130] sm:$0xff]
      %v265 = vld [vmem:[%s207 + $0x138] sm:$0xff]
      %v266 = vld [vmem:[%s207 + $0x140] sm:$0xff]
      %v267 = vld [vmem:[%s207 + $0x148] sm:$0xff]
      %v268 = vld [vmem:[%s207 + $0x150] sm:$0xff]
      %v269 = vld [vmem:[%s207 + $0x158] sm:$0xff]
      %v270 = vld [vmem:[%s207 + $0x160] sm:$0xff]
      %v271 = vld [vmem:[%s207 + $0x168] sm:$0xff]
      %v272 = vld [vmem:[%s207 + $0x170] sm:$0xff]
      %v273 = vld [vmem:[%s207 + $0x178] sm:$0xff]
      %v274 = vld [vmem:[%s207 + $0x180] sm:$0xff]
      %v275 = vld [vmem:[%s207 + $0x188] sm:$0xff]
      %v276 = vld [vmem:[%s207 + $0x190] sm:$0xff]
      %v277 = vld [vmem:[%s207 + $0x198] sm:$0xff]
      %v278 = vld [vmem:[%s207 + $0x1a0] sm:$0xff]
      %v279 = vld [vmem:[%s207 + $0x1a8] sm:$0xff]
      %v280 = vld [vmem:[%s207 + $0x1b0] sm:$0xff]
      %v281 = vld [vmem:[%s207 + $0x1b8] sm:$0xff]
      %v282 = vld [vmem:[%s207 + $0x1c0] sm:$0xff]
      %v283 = vld [vmem:[%s207 + $0x1c8] sm:$0xff]
      %v284 = vld [vmem:[%s207 + $0x1d0] sm:$0xff]
      %v285 = vld [vmem:[%s207 + $0x1d8] sm:$0xff]
      %v286 = vld [vmem:[%s207 + $0x1e0] sm:$0xff]
      %v287 = vld [vmem:[%s207 + $0x1e8] sm:$0xff]
      %v288 = vld [vmem:[%s207 + $0x1f0] sm:$0xff]
      %v289 = vld [vmem:[%s207 + $0x1f8] sm:$0xff]
      %v290 = vpack.c.bf16 %v227, %v226
      %v291 = vpack.c.bf16 %v229, %v228
      %v292 = vpack.c.bf16 %v231, %v230
      %v293 = vpack.c.bf16 %v233, %v232
      %v294 = vpack.c.bf16 %v235, %v234
      %v295 = vpack.c.bf16 %v237, %v236
      %v296 = vpack.c.bf16 %v239, %v238
      %v297 = vpack.c.bf16 %v241, %v240
      %v298 = vpack.c.bf16 %v243, %v242
      %v299 = vpack.c.bf16 %v245, %v244
      %v300 = vpack.c.bf16 %v247, %v246
      %v301 = vpack.c.bf16 %v249, %v248
      %v302 = vpack.c.bf16 %v251, %v250
      %v303 = vpack.c.bf16 %v253, %v252
      %v304 = vpack.c.bf16 %v255, %v254
      %v305 = vpack.c.bf16 %v257, %v256
      %v306 = vpack.c.bf16 %v259, %v258
      %v307 = vpack.c.bf16 %v261, %v260
      %v308 = vpack.c.bf16 %v263, %v262
      %v309 = vpack.c.bf16 %v265, %v264
      %v310 = vpack.c.bf16 %v267, %v266
      %v311 = vpack.c.bf16 %v269, %v268
      %v312 = vpack.c.bf16 %v271, %v270
      %v313 = vpack.c.bf16 %v273, %v272
      %v314 = vpack.c.bf16 %v275, %v274
      %v315 = vpack.c.bf16 %v277, %v276
      %v316 = vpack.c.bf16 %v279, %v278
      %v317 = vpack.c.bf16 %v281, %v280
      %v318 = vpack.c.bf16 %v283, %v282
      %v319 = vpack.c.bf16 %v285, %v284
      %v320 = vpack.c.bf16 %v287, %v286
      %v321 = vpack.c.bf16 %v289, %v288
      %v322 = vld [vmem:[%s212] sm:$0xff]
      %v323 = vld [vmem:[%s212 + $0x8] sm:$0xff]
      %v324 = vld [vmem:[%s212 + $0x10] sm:$0xff]
      %v325 = vld [vmem:[%s212 + $0x18] sm:$0xff]
      %v326 = vpack.c.bf16 %v323, %v322
      %v327 = vpack.c.bf16 %v325, %v324
      %v328 = vld [vmem:[%s215] sm:$0x1]
      %v330 = vlaneseq
      %v331 = vshrl.u32 %v330, 7
      %v332 = vsub.s32 0, %v331
      %v333 = vrot.slane %v328, %v332
      %vm335 = vcmask 261120
      %v337 = vsel %vm335, %v290, 0
      %v340 = vsel %vm335, %v291, 0
      %v343 = vsel %vm335, %v292, 0
      %v346 = vsel %vm335, %v293, 0
      %v349 = vsel %vm335, %v294, 0
      %v352 = vsel %vm335, %v295, 0
      %v355 = vsel %vm335, %v296, 0
      %v358 = vsel %vm335, %v297, 0
      %v361 = vsel %vm335, %v298, 0
      %v364 = vsel %vm335, %v299, 0
      %v367 = vsel %vm335, %v300, 0
      %v370 = vsel %vm335, %v301, 0
      %v373 = vsel %vm335, %v302, 0
      %v376 = vsel %vm335, %v303, 0
      %v379 = vsel %vm335, %v304, 0
      %v382 = vsel %vm335, %v305, 0
      %v385 = vsel %vm335, %v306, 0
      %v388 = vsel %vm335, %v307, 0
      %v391 = vsel %vm335, %v308, 0
      %v394 = vsel %vm335, %v309, 0
      %v397 = vsel %vm335, %v310, 0
      %v400 = vsel %vm335, %v311, 0
      %v403 = vsel %vm335, %v312, 0
      %v406 = vsel %vm335, %v313, 0
      %v409 = vsel %vm335, %v314, 0
      %v412 = vsel %vm335, %v315, 0
      %v415 = vsel %vm335, %v316, 0
      %v418 = vsel %vm335, %v317, 0
      %v421 = vsel %vm335, %v318, 0
      %v424 = vsel %vm335, %v319, 0
      %v427 = vsel %vm335, %v320, 0
      %v430 = vsel %vm335, %v321, 0
      %432 = vmatprep.subr.bf16.mxu0 0
      %433 = vmatpush1.bf16.msra.mxu0 %v326
      %434 = vmatprep.subr.bf16.mxu0 0
      %435 = vmatpush1.bf16.msra.mxu0 %v327
      %436 = vmatprep.subr.bf16.mxu0 0
      %437 = vmatpush1.bf16.msra.mxu0 0
      %438 = vmatprep.subr.bf16.mxu0 0
      %439 = vmatpush1.bf16.msra.mxu0 0
      %440 = vmatprep.subr.bf16.mxu0 0
      %441 = vmatpush1.bf16.msra.mxu0 0
      %442 = vmatprep.subr.bf16.mxu0 0
      %443 = vmatpush1.bf16.msra.mxu0 0
      %444 = vmatprep.subr.bf16.mxu0 0
      %445 = vmatpush1.bf16.msra.mxu0 0
      %446 = vmatprep.subr.bf16.mxu0 0
      %447 = vmatpush1.bf16.msra.mxu0 0
      %448 = vmatprep.subr.bf16.mxu0 0
      %449 = vmatpush1.bf16.msra.mxu0 0
      %450 = vmatprep.subr.bf16.mxu0 0
      %451 = vmatpush1.bf16.msra.mxu0 0
      %452 = vmatprep.subr.bf16.mxu0 0
      %453 = vmatpush1.bf16.msra.mxu0 0
      %454 = vmatprep.subr.bf16.mxu0 0
      %455 = vmatpush1.bf16.msra.mxu0 0
      %456 = vmatprep.subr.bf16.mxu0 0
      %457 = vmatpush1.bf16.msra.mxu0 0
      %458 = vmatprep.subr.bf16.mxu0 0
      %459 = vmatpush1.bf16.msra.mxu0 0
      %460 = vmatprep.subr.bf16.mxu0 0
      %461 = vmatpush1.bf16.msra.mxu0 0
      %462 = vmatprep.subr.bf16.mxu0 0
      %463 = vmatpush1.bf16.msra.mxu0 0
      %464 = vmatprep.mubr.bf16.mxu0 0
      %465 = vmatmul.mubr.bf16.gmra.mrb[0].mxu0 %v337
      %v466 = vpop.f32.mrb[0].mxu0
      %v467 = vadd.f32 %v333, %v466
      %v468 = vpop.f32.mrb[0].mxu0
      %v469 = vpop.f32.mrb[0].mxu0
      %v470 = vadd.f32 %v333, %v469
      %v471 = vpop.f32.mrb[0].mxu0
      %472 = vmatprep.mubr.bf16.mxu0 0
      %473 = vmatmul.mubr.bf16.gmra.mrb[0].mxu0 %v340
      %v474 = vpop.f32.mrb[0].mxu0
      %v475 = vadd.f32 %v333, %v474
      %v476 = vpop.f32.mrb[0].mxu0
      %v477 = vpop.f32.mrb[0].mxu0
      %v478 = vadd.f32 %v333, %v477
      %v479 = vpop.f32.mrb[0].mxu0
      %480 = vmatprep.mubr.bf16.mxu0 0
      %481 = vmatmul.mubr.bf16.gmra.mrb[0].mxu0 %v343
      %v482 = vpop.f32.mrb[0].mxu0
      %v483 = vadd.f32 %v333, %v482
      %v484 = vpop.f32.mrb[0].mxu0
      %v485 = vpop.f32.mrb[0].mxu0
      %v486 = vadd.f32 %v333, %v485
      %v487 = vpop.f32.mrb[0].mxu0
      %488 = vmatprep.mubr.bf16.mxu0 0
      %489 = vmatmul.mubr.bf16.gmra.mrb[0].mxu0 %v346
      %v490 = vpop.f32.mrb[0].mxu0
      %v491 = vadd.f32 %v333, %v490
      %v492 = vpop.f32.mrb[0].mxu0
      %v493 = vpop.f32.mrb[0].mxu0
      %v494 = vadd.f32 %v333, %v493
      %v495 = vpop.f32.mrb[0].mxu0
      %496 = vmatprep.mubr.bf16.mxu0 0
      %497 = vmatmul.mubr.bf16.gmra.mrb[0].mxu0 %v349
      %v498 = vpop.f32.mrb[0].mxu0
      %v499 = vadd.f32 %v333, %v498
      %v500 = vpop.f32.mrb[0].mxu0
      %v501 = vpop.f32.mrb[0].mxu0
      %v502 = vadd.f32 %v333, %v501
      %v503 = vpop.f32.mrb[0].mxu0
      %504 = vmatprep.mubr.bf16.mxu0 0
      %505 = vmatmul.mubr.bf16.gmra.mrb[0].mxu0 %v352
      %v506 = vpop.f32.mrb[0].mxu0
      %v507 = vadd.f32 %v333, %v506
      %v508 = vpop.f32.mrb[0].mxu0
      %v509 = vpop.f32.mrb[0].mxu0
      %v510 = vadd.f32 %v333, %v509
      %v511 = vpop.f32.mrb[0].mxu0
      %512 = vmatprep.mubr.bf16.mxu0 0
      %513 = vmatmul.mubr.bf16.gmra.mrb[0].mxu0 %v355
      %v514 = vpop.f32.mrb[0].mxu0
      %v515 = vadd.f32 %v333, %v514
      %v516 = vpop.f32.mrb[0].mxu0
      %v517 = vpop.f32.mrb[0].mxu0
      %v518 = vadd.f32 %v333, %v517
      %v519 = vpop.f32.mrb[0].mxu0
      %520 = vmatprep.mubr.bf16.mxu0 0
      %521 = vmatmul.mubr.bf16.gmra.mrb[0].mxu0 %v358
      %v522 = vpop.f32.mrb[0].mxu0
      %v523 = vadd.f32 %v333, %v522
      %v524 = vpop.f32.mrb[0].mxu0
      %v525 = vpop.f32.mrb[0].mxu0
      %v526 = vadd.f32 %v333, %v525
      %v527 = vpop.f32.mrb[0].mxu0
      %528 = vmatprep.mubr.bf16.mxu0 0
      %529 = vmatmul.mubr.bf16.gmra.mrb[0].mxu0 %v361
      %v530 = vpop.f32.mrb[0].mxu0
      %v531 = vadd.f32 %v333, %v530
      %v532 = vpop.f32.mrb[0].mxu0
      %v533 = vpop.f32.mrb[0].mxu0
      %v534 = vadd.f32 %v333, %v533
      %v535 = vpop.f32.mrb[0].mxu0
      %536 = vmatprep.mubr.bf16.mxu0 0
      %537 = vmatmul.mubr.bf16.gmra.mrb[0].mxu0 %v364
      %v538 = vpop.f32.mrb[0].mxu0
      %v539 = vadd.f32 %v333, %v538
      %v540 = vpop.f32.mrb[0].mxu0
      %v541 = vpop.f32.mrb[0].mxu0
      %v542 = vadd.f32 %v333, %v541
      %v543 = vpop.f32.mrb[0].mxu0
      %544 = vmatprep.mubr.bf16.mxu0 0
      %545 = vmatmul.mubr.bf16.gmra.mrb[0].mxu0 %v367
      %v546 = vpop.f32.mrb[0].mxu0
      %v547 = vadd.f32 %v333, %v546
      %v548 = vpop.f32.mrb[0].mxu0
      %v549 = vpop.f32.mrb[0].mxu0
      %v550 = vadd.f32 %v333, %v549
      %v551 = vpop.f32.mrb[0].mxu0
      %552 = vmatprep.mubr.bf16.mxu0 0
      %553 = vmatmul.mubr.bf16.gmra.mrb[0].mxu0 %v370
      %v554 = vpop.f32.mrb[0].mxu0
      %v555 = vadd.f32 %v333, %v554
      %v556 = vpop.f32.mrb[0].mxu0
      %v557 = vpop.f32.mrb[0].mxu0
      %v558 = vadd.f32 %v333, %v557
      %v559 = vpop.f32.mrb[0].mxu0
      %560 = vmatprep.mubr.bf16.mxu0 0
      %561 = vmatmul.mubr.bf16.gmra.mrb[0].mxu0 %v373
      %v562 = vpop.f32.mrb[0].mxu0
      %v563 = vadd.f32 %v333, %v562
      %v564 = vpop.f32.mrb[0].mxu0
      %v565 = vpop.f32.mrb[0].mxu0
      %v566 = vadd.f32 %v333, %v565
      %v567 = vpop.f32.mrb[0].mxu0
      %568 = vmatprep.mubr.bf16.mxu0 0
      %569 = vmatmul.mubr.bf16.gmra.mrb[0].mxu0 %v376
      %v570 = vpop.f32.mrb[0].mxu0
      %v571 = vadd.f32 %v333, %v570
      %v572 = vpop.f32.mrb[0].mxu0
      %v573 = vpop.f32.mrb[0].mxu0
      %v574 = vadd.f32 %v333, %v573
      %v575 = vpop.f32.mrb[0].mxu0
      %576 = vmatprep.mubr.bf16.mxu0 0
      %577 = vmatmul.mubr.bf16.gmra.mrb[0].mxu0 %v379
      %v578 = vpop.f32.mrb[0].mxu0
      %v579 = vadd.f32 %v333, %v578
      %v580 = vpop.f32.mrb[0].mxu0
      %v581 = vpop.f32.mrb[0].mxu0
      %v582 = vadd.f32 %v333, %v581
      %v583 = vpop.f32.mrb[0].mxu0
      %584 = vmatprep.mubr.bf16.mxu0 0
      %585 = vmatmul.mubr.bf16.gmra.mrb[0].mxu0 %v382
      %v586 = vpop.f32.mrb[0].mxu0
      %v587 = vadd.f32 %v333, %v586
      %v588 = vpop.f32.mrb[0].mxu0
      %v589 = vpop.f32.mrb[0].mxu0
      %v590 = vadd.f32 %v333, %v589
      %v591 = vpop.f32.mrb[0].mxu0
      %592 = vmatprep.mubr.bf16.mxu0 0
      %593 = vmatmul.mubr.bf16.gmra.mrb[0].mxu0 %v385
      %v594 = vpop.f32.mrb[0].mxu0
      %v595 = vadd.f32 %v333, %v594
      %v596 = vpop.f32.mrb[0].mxu0
      %v597 = vpop.f32.mrb[0].mxu0
      %v598 = vadd.f32 %v333, %v597
      %v599 = vpop.f32.mrb[0].mxu0
      %600 = vmatprep.mubr.bf16.mxu0 0
      %601 = vmatmul.mubr.bf16.gmra.mrb[0].mxu0 %v388
      %v602 = vpop.f32.mrb[0].mxu0
      %v603 = vadd.f32 %v333, %v602
      %v604 = vpop.f32.mrb[0].mxu0
      %v605 = vpop.f32.mrb[0].mxu0
      %v606 = vadd.f32 %v333, %v605
      %v607 = vpop.f32.mrb[0].mxu0
      %608 = vmatprep.mubr.bf16.mxu0 0
      %609 = vmatmul.mubr.bf16.gmra.mrb[0].mxu0 %v391
      %v610 = vpop.f32.mrb[0].mxu0
      %v611 = vadd.f32 %v333, %v610
      %v612 = vpop.f32.mrb[0].mxu0
      %v613 = vpop.f32.mrb[0].mxu0
      %v614 = vadd.f32 %v333, %v613
      %v615 = vpop.f32.mrb[0].mxu0
      %616 = vmatprep.mubr.bf16.mxu0 0
      %617 = vmatmul.mubr.bf16.gmra.mrb[0].mxu0 %v394
      %v618 = vpop.f32.mrb[0].mxu0
      %v619 = vadd.f32 %v333, %v618
      %v620 = vpop.f32.mrb[0].mxu0
      %v621 = vpop.f32.mrb[0].mxu0
      %v622 = vadd.f32 %v333, %v621
      %v623 = vpop.f32.mrb[0].mxu0
      %624 = vmatprep.mubr.bf16.mxu0 0
      %625 = vmatmul.mubr.bf16.gmra.mrb[0].mxu0 %v397
      %v626 = vpop.f32.mrb[0].mxu0
      %v627 = vadd.f32 %v333, %v626
      %v628 = vpop.f32.mrb[0].mxu0
      %v629 = vpop.f32.mrb[0].mxu0
      %v630 = vadd.f32 %v333, %v629
      %v631 = vpop.f32.mrb[0].mxu0
      %632 = vmatprep.mubr.bf16.mxu0 0
      %633 = vmatmul.mubr.bf16.gmra.mrb[0].mxu0 %v400
      %v634 = vpop.f32.mrb[0].mxu0
      %v635 = vadd.f32 %v333, %v634
      %v636 = vpop.f32.mrb[0].mxu0
      %v637 = vpop.f32.mrb[0].mxu0
      %v638 = vadd.f32 %v333, %v637
      %v639 = vpop.f32.mrb[0].mxu0
      %640 = vmatprep.mubr.bf16.mxu0 0
      %641 = vmatmul.mubr.bf16.gmra.mrb[0].mxu0 %v403
      %v642 = vpop.f32.mrb[0].mxu0
      %v643 = vadd.f32 %v333, %v642
      %v644 = vpop.f32.mrb[0].mxu0
      %v645 = vpop.f32.mrb[0].mxu0
      %v646 = vadd.f32 %v333, %v645
      %v647 = vpop.f32.mrb[0].mxu0
      %648 = vmatprep.mubr.bf16.mxu0 0
      %649 = vmatmul.mubr.bf16.gmra.mrb[0].mxu0 %v406
      %v650 = vpop.f32.mrb[0].mxu0
      %v651 = vadd.f32 %v333, %v650
      %v652 = vpop.f32.mrb[0].mxu0
      %v653 = vpop.f32.mrb[0].mxu0
      %v654 = vadd.f32 %v333, %v653
      %v655 = vpop.f32.mrb[0].mxu0
      %656 = vmatprep.mubr.bf16.mxu0 0
      %657 = vmatmul.mubr.bf16.gmra.mrb[0].mxu0 %v409
      %v658 = vpop.f32.mrb[0].mxu0
      %v659 = vadd.f32 %v333, %v658
      %v660 = vpop.f32.mrb[0].mxu0
      %v661 = vpop.f32.mrb[0].mxu0
      %v662 = vadd.f32 %v333, %v661
      %v663 = vpop.f32.mrb[0].mxu0
      %664 = vmatprep.mubr.bf16.mxu0 0
      %665 = vmatmul.mubr.bf16.gmra.mrb[0].mxu0 %v412
      %v666 = vpop.f32.mrb[0].mxu0
      %v667 = vadd.f32 %v333, %v666
      %v668 = vpop.f32.mrb[0].mxu0
      %v669 = vpop.f32.mrb[0].mxu0
      %v670 = vadd.f32 %v333, %v669
      %v671 = vpop.f32.mrb[0].mxu0
      %672 = vmatprep.mubr.bf16.mxu0 0
      %673 = vmatmul.mubr.bf16.gmra.mrb[0].mxu0 %v415
      %v674 = vpop.f32.mrb[0].mxu0
      %v675 = vadd.f32 %v333, %v674
      %v676 = vpop.f32.mrb[0].mxu0
      %v677 = vpop.f32.mrb[0].mxu0
      %v678 = vadd.f32 %v333, %v677
      %v679 = vpop.f32.mrb[0].mxu0
      %680 = vmatprep.mubr.bf16.mxu0 0
      %681 = vmatmul.mubr.bf16.gmra.mrb[0].mxu0 %v418
      %v682 = vpop.f32.mrb[0].mxu0
      %v683 = vadd.f32 %v333, %v682
      %v684 = vpop.f32.mrb[0].mxu0
      %v685 = vpop.f32.mrb[0].mxu0
      %v686 = vadd.f32 %v333, %v685
      %v687 = vpop.f32.mrb[0].mxu0
      %688 = vmatprep.mubr.bf16.mxu0 0
      %689 = vmatmul.mubr.bf16.gmra.mrb[0].mxu0 %v421
      %v690 = vpop.f32.mrb[0].mxu0
      %v691 = vadd.f32 %v333, %v690
      %v692 = vpop.f32.mrb[0].mxu0
      %v693 = vpop.f32.mrb[0].mxu0
      %v694 = vadd.f32 %v333, %v693
      %v695 = vpop.f32.mrb[0].mxu0
      %696 = vmatprep.mubr.bf16.mxu0 0
      %697 = vmatmul.mubr.bf16.gmra.mrb[0].mxu0 %v424
      %v698 = vpop.f32.mrb[0].mxu0
      %v699 = vadd.f32 %v333, %v698
      %v700 = vpop.f32.mrb[0].mxu0
      %v701 = vpop.f32.mrb[0].mxu0
      %v702 = vadd.f32 %v333, %v701
      %v703 = vpop.f32.mrb[0].mxu0
      %704 = vmatprep.mubr.bf16.mxu0 0
      %705 = vmatmul.mubr.bf16.gmra.mrb[0].mxu0 %v427
      %v706 = vpop.f32.mrb[0].mxu0
      %v707 = vadd.f32 %v333, %v706
      %v708 = vpop.f32.mrb[0].mxu0
      %v709 = vpop.f32.mrb[0].mxu0
      %v710 = vadd.f32 %v333, %v709
      %v711 = vpop.f32.mrb[0].mxu0
      %712 = vmatprep.mubr.bf16.mxu0 0
      %713 = vmatmul.mubr.bf16.gmra.mrb[0].mxu0 %v430
      %v714 = vpop.f32.mrb[0].mxu0
      %v715 = vadd.f32 %v333, %v714
      %v716 = vpop.f32.mrb[0].mxu0
      %v717 = vpop.f32.mrb[0].mxu0
      %v718 = vadd.f32 %v333, %v717
      %v719 = vpop.f32.mrb[0].mxu0
      %720 = vdwg.mxu0
      %vm721 = vcmask 130048
      %722 = vst.msk [vmem:[%s223] sm:$0xff] %vm721, %v467
      %723 = vst.msk [vmem:[%s223 + $0x8] sm:$0xff] %vm721, %v470
      %724 = vst.msk [vmem:[%s223 + $0x10] sm:$0xff] %vm721, %v475
      %725 = vst.msk [vmem:[%s223 + $0x18] sm:$0xff] %vm721, %v478
      %726 = vst.msk [vmem:[%s223 + $0x20] sm:$0xff] %vm721, %v483
      %727 = vst.msk [vmem:[%s223 + $0x28] sm:$0xff] %vm721, %v486
      %728 = vst.msk [vmem:[%s223 + $0x30] sm:$0xff] %vm721, %v491
      %729 = vst.msk [vmem:[%s223 + $0x38] sm:$0xff] %vm721, %v494
      %730 = vst.msk [vmem:[%s223 + $0x40] sm:$0xff] %vm721, %v499
      %731 = vst.msk [vmem:[%s223 + $0x48] sm:$0xff] %vm721, %v502
      %732 = vst.msk [vmem:[%s223 + $0x50] sm:$0xff] %vm721, %v507
      %733 = vst.msk [vmem:[%s223 + $0x58] sm:$0xff] %vm721, %v510
      %734 = vst.msk [vmem:[%s223 + $0x60] sm:$0xff] %vm721, %v515
      %735 = vst.msk [vmem:[%s223 + $0x68] sm:$0xff] %vm721, %v518
      %736 = vst.msk [vmem:[%s223 + $0x70] sm:$0xff] %vm721, %v523
      %737 = vst.msk [vmem:[%s223 + $0x78] sm:$0xff] %vm721, %v526
      %738 = vst.msk [vmem:[%s223 + $0x80] sm:$0xff] %vm721, %v531
      %739 = vst.msk [vmem:[%s223 + $0x88] sm:$0xff] %vm721, %v534
      %740 = vst.msk [vmem:[%s223 + $0x90] sm:$0xff] %vm721, %v539
      %741 = vst.msk [vmem:[%s223 + $0x98] sm:$0xff] %vm721, %v542
      %742 = vst.msk [vmem:[%s223 + $0xa0] sm:$0xff] %vm721, %v547
      %743 = vst.msk [vmem:[%s223 + $0xa8] sm:$0xff] %vm721, %v550
      %744 = vst.msk [vmem:[%s223 + $0xb0] sm:$0xff] %vm721, %v555
      %745 = vst.msk [vmem:[%s223 + $0xb8] sm:$0xff] %vm721, %v558
      %746 = vst.msk [vmem:[%s223 + $0xc0] sm:$0xff] %vm721, %v563
      %747 = vst.msk [vmem:[%s223 + $0xc8] sm:$0xff] %vm721, %v566
      %748 = vst.msk [vmem:[%s223 + $0xd0] sm:$0xff] %vm721, %v571
      %749 = vst.msk [vmem:[%s223 + $0xd8] sm:$0xff] %vm721, %v574
      %750 = vst.msk [vmem:[%s223 + $0xe0] sm:$0xff] %vm721, %v579
      %751 = vst.msk [vmem:[%s223 + $0xe8] sm:$0xff] %vm721, %v582
      %752 = vst.msk [vmem:[%s223 + $0xf0] sm:$0xff] %vm721, %v587
      %753 = vst.msk [vmem:[%s223 + $0xf8] sm:$0xff] %vm721, %v590
      %754 = vst.msk [vmem:[%s223 + $0x100] sm:$0xff] %vm721, %v595
      %755 = vst.msk [vmem:[%s223 + $0x108] sm:$0xff] %vm721, %v598
      %756 = vst.msk [vmem:[%s223 + $0x110] sm:$0xff] %vm721, %v603
      %757 = vst.msk [vmem:[%s223 + $0x118] sm:$0xff] %vm721, %v606
      %758 = vst.msk [vmem:[%s223 + $0x120] sm:$0xff] %vm721, %v611
      %759 = vst.msk [vmem:[%s223 + $0x128] sm:$0xff] %vm721, %v614
      %760 = vst.msk [vmem:[%s223 + $0x130] sm:$0xff] %vm721, %v619
      %761 = vst.msk [vmem:[%s223 + $0x138] sm:$0xff] %vm721, %v622
      %762 = vst.msk [vmem:[%s223 + $0x140] sm:$0xff] %vm721, %v627
      %763 = vst.msk [vmem:[%s223 + $0x148] sm:$0xff] %vm721, %v630
      %764 = vst.msk [vmem:[%s223 + $0x150] sm:$0xff] %vm721, %v635
      %765 = vst.msk [vmem:[%s223 + $0x158] sm:$0xff] %vm721, %v638
      %766 = vst.msk [vmem:[%s223 + $0x160] sm:$0xff] %vm721, %v643
      %767 = vst.msk [vmem:[%s223 + $0x168] sm:$0xff] %vm721, %v646
      %768 = vst.msk [vmem:[%s223 + $0x170] sm:$0xff] %vm721, %v651
      %769 = vst.msk [vmem:[%s223 + $0x178] sm:$0xff] %vm721, %v654
      %770 = vst.msk [vmem:[%s223 + $0x180] sm:$0xff] %vm721, %v659
      %771 = vst.msk [vmem:[%s223 + $0x188] sm:$0xff] %vm721, %v662
      %772 = vst.msk [vmem:[%s223 + $0x190] sm:$0xff] %vm721, %v667
      %773 = vst.msk [vmem:[%s223 + $0x198] sm:$0xff] %vm721, %v670
      %774 = vst.msk [vmem:[%s223 + $0x1a0] sm:$0xff] %vm721, %v675
      %775 = vst.msk [vmem:[%s223 + $0x1a8] sm:$0xff] %vm721, %v678
      %776 = vst.msk [vmem:[%s223 + $0x1b0] sm:$0xff] %vm721, %v683
      %777 = vst.msk [vmem:[%s223 + $0x1b8] sm:$0xff] %vm721, %v686
      %778 = vst.msk [vmem:[%s223 + $0x1c0] sm:$0xff] %vm721, %v691
      %779 = vst.msk [vmem:[%s223 + $0x1c8] sm:$0xff] %vm721, %v694
      %780 = vst.msk [vmem:[%s223 + $0x1d0] sm:$0xff] %vm721, %v699
      %781 = vst.msk [vmem:[%s223 + $0x1d8] sm:$0xff] %vm721, %v702
      %782 = vst.msk [vmem:[%s223 + $0x1e0] sm:$0xff] %vm721, %v707
      %783 = vst.msk [vmem:[%s223 + $0x1e8] sm:$0xff] %vm721, %v710
      %784 = vst.msk [vmem:[%s223 + $0x1f0] sm:$0xff] %vm721, %v715
      %785 = vst.msk [vmem:[%s223 + $0x1f8] sm:$0xff] %vm721, %v718
      %s786 = smul.u32 64, %s18
      %p787 = scmp.lt.s32.totalorder %s786, 127
      %s788 = scalar_select %p787, %s786, 127
      %p789 = scmp.lt.s32.totalorder %s19, 0
      %s790 = scalar_select %p789, %s19, 0
      %s791 = sadd.s32 %s790, %s788
      %s792 = smul.addr %s791, 8
      %s793 = scalar_lea.vmem %s3, %s792
      // Predicated region
      $region33: #{base_model_forward.1} parent=31 // pred_check
        %p794 = pneg %p124
      $region34: #{base_model_forward.1} parent=31 // pred_check_branch
        %796 = sbr.rel (%p794) target = $region36
      $region35: #{base_model_forward.1} parent=31 // pred_region
        %s797 = smul.u32 64, %s18
      $region36: #{base_model_forward.1} parent=31 // pred_fallthru
        _
    $region32: #{base_model_forward.1} parent=5 // pred_fallthru
      _
    %p798 = scmp.le.s32.totalorder 2, %s9
    // Predicated region
    $region37: #{base_model_forward.1} parent=5 // pred_check
      %p799 = pneg %p798
    $region38: #{base_model_forward.1} parent=5 // pred_check_branch
      %801 = sbr.rel (%p799) target = $region40
    $region39: #{base_model_forward.1} parent=5 // pred_region
      %s802 = ssub.s32 %s9, 2
      // Predicated region
      $region41: #{base_model_forward.1} parent=39 // pred_check
        %p803 = pneg %p130
      $region42: #{base_model_forward.1} parent=39 // pred_check_branch
        %805 = sbr.rel (%p803) target = $region44
      $region43: #{base_model_forward.1} parent=39 // pred_region
        %s806 = smul.u32 64, %s20
        %p807 = scmp.lt.s32.totalorder %s806, 127
        %s808 = scalar_select %p807, %s806, 127
        %p809 = scmp.lt.s32.totalorder %s21, 0
        %s810 = scalar_select %p809, %s21, 0
        %s811 = sadd.s32 %s810, %s808
        %s812 = smul.addr %s811, 8
        %s813 = scalar_lea.vmem %s3, %s812
      $region44: #{base_model_forward.1} parent=39 // pred_fallthru
        _
    $region40: #{base_model_forward.1} parent=5 // pred_fallthru
      _
  $region6: #{base_model_forward.1} parent=0 // loop_footer
    %s13 = sadd.s32 1, %s9
  $region7: #{base_model_forward.1} parent=0 // loop_footer_branch
    %8 = sbr.rel target = $region3
  $region8: #{base_model_forward.1} parent=0 // loop_exit
    _

</llo_original>
